<compile_context>
chip_gen: v5e
topology: v5e:2x2
jax: 0.10.0
libtpu: 0.0.40
codegen_flags: <defaults>
</compile_context>

<pallas_src>
import jax
import jax.numpy as jnp
from jax.experimental import pallas as pl
from jax.experimental.pallas import tpu as pltpu

N_IN, N1, N2, N3, N4, N_OUT = 35 * 5, 128, 64, 64, 16, 1
BN_EPS = 1e-5
P_DROP = 0.1


def _linear_relu_bn(h_in, w_ref, b_ref, g_ref, be_ref, inv_b):
    """Linear (MXU, f32 acc) -> ReLU -> BatchNorm1d (batch stats, folded scale/shift)."""
    h = jnp.dot(h_in, w_ref[...], preferred_element_type=jnp.float32) + b_ref[...]
    h = jnp.maximum(h, 0.0)
    # One-pass stats: sum and sum-of-squares over the batch axis.
    s1 = jnp.sum(h, axis=0, keepdims=True)
    s2 = jnp.sum(h * h, axis=0, keepdims=True)
    mu = s1 * inv_b
    var = jnp.maximum(s2 * inv_b - mu * mu, 0.0)   # biased var; clamp fp cancellation
    scale = g_ref[...] * jax.lax.rsqrt(var + BN_EPS)
    shift = be_ref[...] - mu * scale
    return h * scale + shift                        # single fused scale/shift


def mlp_kernel(x_ref, drop_ref,
               w1_ref, b1_ref, g1_ref, be1_ref,
               w2_ref, b2_ref, g2_ref, be2_ref,
               w3_ref, b3_ref, g3_ref, be3_ref,
               w4_ref, b4_ref, g4_ref, be4_ref,
               wo_ref, bo_ref,
               o_ref):
    B = x_ref.shape[0]
    inv_b = jnp.float32(1.0 / B)

    h = _linear_relu_bn(x_ref[...], w1_ref, b1_ref, g1_ref, be1_ref, inv_b)
    h = _linear_relu_bn(h, w2_ref, b2_ref, g2_ref, be2_ref, inv_b)
    h = _linear_relu_bn(h, w3_ref, b3_ref, g3_ref, be3_ref, inv_b)
    h = _linear_relu_bn(h, w4_ref, b4_ref, g4_ref, be4_ref, inv_b)

    # Dropout(p=0.1), training mode: mask is precomputed (0 or 1/(1-p)) -> one VPU mul.
    h = h * drop_ref[...]

    # Final Linear(16 -> 1): K=16, N=1 -> VPU multiply + XLU lane reduce (no MXU).
    o_ref[...] = jnp.sum(h * wo_ref[...], axis=-1, keepdims=True) + bo_ref[...]


def init_params(key):
    """Deterministic params mimicking PyTorch Linear default init; BN gamma=1, beta=0.

    Layers 1-4 weights are stored (in, out); the final 16->1 weight is stored
    transposed as a (1, 16) f32 row for the VPU reduction path.
    """
    dims = [(N_IN, N1), (N1, N2), (N2, N3), (N3, N4), (N4, N_OUT)]
    keys = jax.random.split(key, 2 * len(dims))
    params = []
    for i, (fan_in, fan_out) in enumerate(dims):
        bound = 1.0 / (fan_in ** 0.5)
        w = jax.random.uniform(keys[2 * i], (fan_in, fan_out), jnp.float32, -bound, bound)
        b = jax.random.uniform(keys[2 * i + 1], (1, fan_out), jnp.float32, -bound, bound)
        if i < 4:  # BatchNorm follows layers 1..4
            params += [w, b,
                       jnp.ones((1, fan_out), jnp.float32),
                       jnp.zeros((1, fan_out), jnp.float32)]
        else:
            params += [w.T, b]   # (1, 16) row + (1, 1) bias
    return params


def binary_classification_forward(x, params, dropout_key):
    B = x.shape[0]
    # Training-mode inverted dropout mask, folded with the 1/(1-p) scale.
    keep = jax.random.bernoulli(dropout_key, 1.0 - P_DROP, (B, N4))
    drop_mask = keep.astype(jnp.float32) * jnp.float32(1.0 / (1.0 - P_DROP))

    n_vmem_inputs = 2 + len(params)   # x + dropout mask + all weights / BN params
    return pl.pallas_call(
        mlp_kernel,
        out_shape=jax.ShapeDtypeStruct((B, N_OUT), jnp.float32),
        in_specs=[pl.BlockSpec(memory_space=pltpu.MemorySpace.VMEM)] * n_vmem_inputs,
        out_specs=pl.BlockSpec(memory_space=pltpu.MemorySpace.VMEM),
    )(x, drop_mask, *params)


if __name__ == "__main__":
    key = jax.random.PRNGKey(0)
    pkey, xkey, dkey = jax.random.split(key, 3)
    params = init_params(pkey)

    batch = 8
    x = jax.random.normal(xkey, (batch, N_IN), jnp.float32)

    out = binary_classification_forward(x, params, dkey)
    out = jax.block_until_ready(out)
    assert out.shape == (batch, N_OUT), out.shape
    print("KERNEL_OK")
</pallas_src>

<mosaic_0001>
module attributes {stable_mosaic.version = 11 : i64} {
  func.func @mlp_kernel(%arg0: memref<8x175xf32, #tpu.memory_space<vmem>>, %arg1: memref<8x16xf32, #tpu.memory_space<vmem>>, %arg2: memref<175x128xf32, #tpu.memory_space<vmem>>, %arg3: memref<1x128xf32, #tpu.memory_space<vmem>>, %arg4: memref<1x128xf32, #tpu.memory_space<vmem>>, %arg5: memref<1x128xf32, #tpu.memory_space<vmem>>, %arg6: memref<128x64xf32, #tpu.memory_space<vmem>>, %arg7: memref<1x64xf32, #tpu.memory_space<vmem>>, %arg8: memref<1x64xf32, #tpu.memory_space<vmem>>, %arg9: memref<1x64xf32, #tpu.memory_space<vmem>>, %arg10: memref<64x64xf32, #tpu.memory_space<vmem>>, %arg11: memref<1x64xf32, #tpu.memory_space<vmem>>, %arg12: memref<1x64xf32, #tpu.memory_space<vmem>>, %arg13: memref<1x64xf32, #tpu.memory_space<vmem>>, %arg14: memref<64x16xf32, #tpu.memory_space<vmem>>, %arg15: memref<1x16xf32, #tpu.memory_space<vmem>>, %arg16: memref<1x16xf32, #tpu.memory_space<vmem>>, %arg17: memref<1x16xf32, #tpu.memory_space<vmem>>, %arg18: memref<1x16xf32, #tpu.memory_space<vmem>>, %arg19: memref<1x1xf32, #tpu.memory_space<vmem>>, %arg20: memref<8x1xf32, #tpu.memory_space<vmem>>) attributes {dimension_semantics = [], scalar_prefetch = 0 : i64, scratch_operands = 0 : i64, tpu.core_type = #tpu.core_type<tc>} {
    %c0 = arith.constant 0 : index
    %c0_0 = arith.constant 0 : index
    %0 = vector.load %arg0[%c0, %c0_0] : memref<8x175xf32, #tpu.memory_space<vmem>>, vector<8x175xf32>
    %c0_1 = arith.constant 0 : index
    %c0_2 = arith.constant 0 : index
    %1 = vector.load %arg2[%c0_1, %c0_2] : memref<175x128xf32, #tpu.memory_space<vmem>>, vector<175x128xf32>
    %cst = arith.constant dense<0.000000e+00> : vector<8x128xf32>
    %2 = tpu.matmul %0, %1, %cst {dimension_numbers = #tpu.dot_dimension_numbers<[1], [0], [0], [1], [0, 0, 1, 1], [], []>} : vector<8x175xf32>, vector<175x128xf32>, vector<8x128xf32> -> vector<8x128xf32>
    %c0_3 = arith.constant 0 : index
    %c0_4 = arith.constant 0 : index
    %3 = vector.load %arg3[%c0_3, %c0_4] : memref<1x128xf32, #tpu.memory_space<vmem>>, vector<1x128xf32>
    %4 = vector.broadcast %3 : vector<1x128xf32> to vector<8x128xf32>
    %5 = arith.addf %2, %4 : vector<8x128xf32>
    %cst_5 = arith.constant 0.000000e+00 : f32
    %6 = vector.broadcast %cst_5 : f32 to vector<8x128xf32>
    %7 = arith.maximumf %5, %6 : vector<8x128xf32>
    %cst_6 = arith.constant dense<0.000000e+00> : vector<128xf32>
    %8 = vector.multi_reduction <add>, %7, %cst_6 [0] : vector<8x128xf32> to vector<128xf32>
    %9 = vector.shape_cast %8 : vector<128xf32> to vector<1x128xf32>
    %10 = arith.mulf %7, %7 : vector<8x128xf32>
    %cst_7 = arith.constant dense<0.000000e+00> : vector<128xf32>
    %11 = vector.multi_reduction <add>, %10, %cst_7 [0] : vector<8x128xf32> to vector<128xf32>
    %12 = vector.shape_cast %11 : vector<128xf32> to vector<1x128xf32>
    %cst_8 = arith.constant 1.250000e-01 : f32
    %13 = vector.broadcast %cst_8 : f32 to vector<1x128xf32>
    %14 = arith.mulf %9, %13 : vector<1x128xf32>
    %cst_9 = arith.constant 1.250000e-01 : f32
    %15 = vector.broadcast %cst_9 : f32 to vector<1x128xf32>
    %16 = arith.mulf %12, %15 : vector<1x128xf32>
    %17 = arith.mulf %14, %14 : vector<1x128xf32>
    %18 = arith.subf %16, %17 : vector<1x128xf32>
    %cst_10 = arith.constant 0.000000e+00 : f32
    %19 = vector.broadcast %cst_10 : f32 to vector<1x128xf32>
    %20 = arith.maximumf %18, %19 : vector<1x128xf32>
    %c0_11 = arith.constant 0 : index
    %c0_12 = arith.constant 0 : index
    %21 = vector.load %arg4[%c0_11, %c0_12] : memref<1x128xf32, #tpu.memory_space<vmem>>, vector<1x128xf32>
    %cst_13 = arith.constant 9.99999974E-6 : f32
    %22 = vector.broadcast %cst_13 : f32 to vector<1x128xf32>
    %23 = arith.addf %20, %22 : vector<1x128xf32>
    %24 = math.rsqrt %23 : vector<1x128xf32>
    %25 = arith.mulf %21, %24 : vector<1x128xf32>
    %c0_14 = arith.constant 0 : index
    %c0_15 = arith.constant 0 : index
    %26 = vector.load %arg5[%c0_14, %c0_15] : memref<1x128xf32, #tpu.memory_space<vmem>>, vector<1x128xf32>
    %27 = arith.mulf %14, %25 : vector<1x128xf32>
    %28 = arith.subf %26, %27 : vector<1x128xf32>
    %29 = vector.broadcast %25 : vector<1x128xf32> to vector<8x128xf32>
    %30 = arith.mulf %7, %29 : vector<8x128xf32>
    %31 = vector.broadcast %28 : vector<1x128xf32> to vector<8x128xf32>
    %32 = arith.addf %30, %31 : vector<8x128xf32>
    %c0_16 = arith.constant 0 : index
    %c0_17 = arith.constant 0 : index
    %33 = vector.load %arg6[%c0_16, %c0_17] : memref<128x64xf32, #tpu.memory_space<vmem>>, vector<128x64xf32>
    %cst_18 = arith.constant dense<0.000000e+00> : vector<8x64xf32>
    %34 = tpu.matmul %32, %33, %cst_18 {dimension_numbers = #tpu.dot_dimension_numbers<[1], [0], [0], [1], [0, 0, 1, 1], [], []>} : vector<8x128xf32>, vector<128x64xf32>, vector<8x64xf32> -> vector<8x64xf32>
    %c0_19 = arith.constant 0 : index
    %c0_20 = arith.constant 0 : index
    %35 = vector.load %arg7[%c0_19, %c0_20] : memref<1x64xf32, #tpu.memory_space<vmem>>, vector<1x64xf32>
    %36 = vector.broadcast %35 : vector<1x64xf32> to vector<8x64xf32>
    %37 = arith.addf %34, %36 : vector<8x64xf32>
    %cst_21 = arith.constant 0.000000e+00 : f32
    %38 = vector.broadcast %cst_21 : f32 to vector<8x64xf32>
    %39 = arith.maximumf %37, %38 : vector<8x64xf32>
    %cst_22 = arith.constant dense<0.000000e+00> : vector<64xf32>
    %40 = vector.multi_reduction <add>, %39, %cst_22 [0] : vector<8x64xf32> to vector<64xf32>
    %41 = vector.shape_cast %40 : vector<64xf32> to vector<1x64xf32>
    %42 = arith.mulf %39, %39 : vector<8x64xf32>
    %cst_23 = arith.constant dense<0.000000e+00> : vector<64xf32>
    %43 = vector.multi_reduction <add>, %42, %cst_23 [0] : vector<8x64xf32> to vector<64xf32>
    %44 = vector.shape_cast %43 : vector<64xf32> to vector<1x64xf32>
    %cst_24 = arith.constant 1.250000e-01 : f32
    %45 = vector.broadcast %cst_24 : f32 to vector<1x64xf32>
    %46 = arith.mulf %41, %45 : vector<1x64xf32>
    %cst_25 = arith.constant 1.250000e-01 : f32
    %47 = vector.broadcast %cst_25 : f32 to vector<1x64xf32>
    %48 = arith.mulf %44, %47 : vector<1x64xf32>
    %49 = arith.mulf %46, %46 : vector<1x64xf32>
    %50 = arith.subf %48, %49 : vector<1x64xf32>
    %cst_26 = arith.constant 0.000000e+00 : f32
    %51 = vector.broadcast %cst_26 : f32 to vector<1x64xf32>
    %52 = arith.maximumf %50, %51 : vector<1x64xf32>
    %c0_27 = arith.constant 0 : index
    %c0_28 = arith.constant 0 : index
    %53 = vector.load %arg8[%c0_27, %c0_28] : memref<1x64xf32, #tpu.memory_space<vmem>>, vector<1x64xf32>
    %cst_29 = arith.constant 9.99999974E-6 : f32
    %54 = vector.broadcast %cst_29 : f32 to vector<1x64xf32>
    %55 = arith.addf %52, %54 : vector<1x64xf32>
    %56 = math.rsqrt %55 : vector<1x64xf32>
    %57 = arith.mulf %53, %56 : vector<1x64xf32>
    %c0_30 = arith.constant 0 : index
    %c0_31 = arith.constant 0 : index
    %58 = vector.load %arg9[%c0_30, %c0_31] : memref<1x64xf32, #tpu.memory_space<vmem>>, vector<1x64xf32>
    %59 = arith.mulf %46, %57 : vector<1x64xf32>
    %60 = arith.subf %58, %59 : vector<1x64xf32>
    %61 = vector.broadcast %57 : vector<1x64xf32> to vector<8x64xf32>
    %62 = arith.mulf %39, %61 : vector<8x64xf32>
    %63 = vector.broadcast %60 : vector<1x64xf32> to vector<8x64xf32>
    %64 = arith.addf %62, %63 : vector<8x64xf32>
    %c0_32 = arith.constant 0 : index
    %c0_33 = arith.constant 0 : index
    %65 = vector.load %arg10[%c0_32, %c0_33] : memref<64x64xf32, #tpu.memory_space<vmem>>, vector<64x64xf32>
    %cst_34 = arith.constant dense<0.000000e+00> : vector<8x64xf32>
    %66 = tpu.matmul %64, %65, %cst_34 {dimension_numbers = #tpu.dot_dimension_numbers<[1], [0], [0], [1], [0, 0, 1, 1], [], []>} : vector<8x64xf32>, vector<64x64xf32>, vector<8x64xf32> -> vector<8x64xf32>
    %c0_35 = arith.constant 0 : index
    %c0_36 = arith.constant 0 : index
    %67 = vector.load %arg11[%c0_35, %c0_36] : memref<1x64xf32, #tpu.memory_space<vmem>>, vector<1x64xf32>
    %68 = vector.broadcast %67 : vector<1x64xf32> to vector<8x64xf32>
    %69 = arith.addf %66, %68 : vector<8x64xf32>
    %cst_37 = arith.constant 0.000000e+00 : f32
    %70 = vector.broadcast %cst_37 : f32 to vector<8x64xf32>
    %71 = arith.maximumf %69, %70 : vector<8x64xf32>
    %cst_38 = arith.constant dense<0.000000e+00> : vector<64xf32>
    %72 = vector.multi_reduction <add>, %71, %cst_38 [0] : vector<8x64xf32> to vector<64xf32>
    %73 = vector.shape_cast %72 : vector<64xf32> to vector<1x64xf32>
    %74 = arith.mulf %71, %71 : vector<8x64xf32>
    %cst_39 = arith.constant dense<0.000000e+00> : vector<64xf32>
    %75 = vector.multi_reduction <add>, %74, %cst_39 [0] : vector<8x64xf32> to vector<64xf32>
    %76 = vector.shape_cast %75 : vector<64xf32> to vector<1x64xf32>
    %cst_40 = arith.constant 1.250000e-01 : f32
    %77 = vector.broadcast %cst_40 : f32 to vector<1x64xf32>
    %78 = arith.mulf %73, %77 : vector<1x64xf32>
    %cst_41 = arith.constant 1.250000e-01 : f32
    %79 = vector.broadcast %cst_41 : f32 to vector<1x64xf32>
    %80 = arith.mulf %76, %79 : vector<1x64xf32>
    %81 = arith.mulf %78, %78 : vector<1x64xf32>
    %82 = arith.subf %80, %81 : vector<1x64xf32>
    %cst_42 = arith.constant 0.000000e+00 : f32
    %83 = vector.broadcast %cst_42 : f32 to vector<1x64xf32>
    %84 = arith.maximumf %82, %83 : vector<1x64xf32>
    %c0_43 = arith.constant 0 : index
    %c0_44 = arith.constant 0 : index
    %85 = vector.load %arg12[%c0_43, %c0_44] : memref<1x64xf32, #tpu.memory_space<vmem>>, vector<1x64xf32>
    %cst_45 = arith.constant 9.99999974E-6 : f32
    %86 = vector.broadcast %cst_45 : f32 to vector<1x64xf32>
    %87 = arith.addf %84, %86 : vector<1x64xf32>
    %88 = math.rsqrt %87 : vector<1x64xf32>
    %89 = arith.mulf %85, %88 : vector<1x64xf32>
    %c0_46 = arith.constant 0 : index
    %c0_47 = arith.constant 0 : index
    %90 = vector.load %arg13[%c0_46, %c0_47] : memref<1x64xf32, #tpu.memory_space<vmem>>, vector<1x64xf32>
    %91 = arith.mulf %78, %89 : vector<1x64xf32>
    %92 = arith.subf %90, %91 : vector<1x64xf32>
    %93 = vector.broadcast %89 : vector<1x64xf32> to vector<8x64xf32>
    %94 = arith.mulf %71, %93 : vector<8x64xf32>
    %95 = vector.broadcast %92 : vector<1x64xf32> to vector<8x64xf32>
    %96 = arith.addf %94, %95 : vector<8x64xf32>
    %c0_48 = arith.constant 0 : index
    %c0_49 = arith.constant 0 : index
    %97 = vector.load %arg14[%c0_48, %c0_49] : memref<64x16xf32, #tpu.memory_space<vmem>>, vector<64x16xf32>
    %cst_50 = arith.constant dense<0.000000e+00> : vector<8x16xf32>
    %98 = tpu.matmul %96, %97, %cst_50 {dimension_numbers = #tpu.dot_dimension_numbers<[1], [0], [0], [1], [0, 0, 1, 1], [], []>} : vector<8x64xf32>, vector<64x16xf32>, vector<8x16xf32> -> vector<8x16xf32>
    %c0_51 = arith.constant 0 : index
    %c0_52 = arith.constant 0 : index
    %99 = vector.load %arg15[%c0_51, %c0_52] : memref<1x16xf32, #tpu.memory_space<vmem>>, vector<1x16xf32>
    %100 = vector.broadcast %99 : vector<1x16xf32> to vector<8x16xf32>
    %101 = arith.addf %98, %100 : vector<8x16xf32>
    %cst_53 = arith.constant 0.000000e+00 : f32
    %102 = vector.broadcast %cst_53 : f32 to vector<8x16xf32>
    %103 = arith.maximumf %101, %102 : vector<8x16xf32>
    %cst_54 = arith.constant dense<0.000000e+00> : vector<16xf32>
    %104 = vector.multi_reduction <add>, %103, %cst_54 [0] : vector<8x16xf32> to vector<16xf32>
    %105 = vector.shape_cast %104 : vector<16xf32> to vector<1x16xf32>
    %106 = arith.mulf %103, %103 : vector<8x16xf32>
    %cst_55 = arith.constant dense<0.000000e+00> : vector<16xf32>
    %107 = vector.multi_reduction <add>, %106, %cst_55 [0] : vector<8x16xf32> to vector<16xf32>
    %108 = vector.shape_cast %107 : vector<16xf32> to vector<1x16xf32>
    %cst_56 = arith.constant 1.250000e-01 : f32
    %109 = vector.broadcast %cst_56 : f32 to vector<1x16xf32>
    %110 = arith.mulf %105, %109 : vector<1x16xf32>
    %cst_57 = arith.constant 1.250000e-01 : f32
    %111 = vector.broadcast %cst_57 : f32 to vector<1x16xf32>
    %112 = arith.mulf %108, %111 : vector<1x16xf32>
    %113 = arith.mulf %110, %110 : vector<1x16xf32>
    %114 = arith.subf %112, %113 : vector<1x16xf32>
    %cst_58 = arith.constant 0.000000e+00 : f32
    %115 = vector.broadcast %cst_58 : f32 to vector<1x16xf32>
    %116 = arith.maximumf %114, %115 : vector<1x16xf32>
    %c0_59 = arith.constant 0 : index
    %c0_60 = arith.constant 0 : index
    %117 = vector.load %arg16[%c0_59, %c0_60] : memref<1x16xf32, #tpu.memory_space<vmem>>, vector<1x16xf32>
    %cst_61 = arith.constant 9.99999974E-6 : f32
    %118 = vector.broadcast %cst_61 : f32 to vector<1x16xf32>
    %119 = arith.addf %116, %118 : vector<1x16xf32>
    %120 = math.rsqrt %119 : vector<1x16xf32>
    %121 = arith.mulf %117, %120 : vector<1x16xf32>
    %c0_62 = arith.constant 0 : index
    %c0_63 = arith.constant 0 : index
    %122 = vector.load %arg17[%c0_62, %c0_63] : memref<1x16xf32, #tpu.memory_space<vmem>>, vector<1x16xf32>
    %123 = arith.mulf %110, %121 : vector<1x16xf32>
    %124 = arith.subf %122, %123 : vector<1x16xf32>
    %125 = vector.broadcast %121 : vector<1x16xf32> to vector<8x16xf32>
    %126 = arith.mulf %103, %125 : vector<8x16xf32>
    %127 = vector.broadcast %124 : vector<1x16xf32> to vector<8x16xf32>
    %128 = arith.addf %126, %127 : vector<8x16xf32>
    %c0_64 = arith.constant 0 : index
    %c0_65 = arith.constant 0 : index
    %129 = vector.load %arg1[%c0_64, %c0_65] : memref<8x16xf32, #tpu.memory_space<vmem>>, vector<8x16xf32>
    %130 = arith.mulf %128, %129 : vector<8x16xf32>
    %c0_66 = arith.constant 0 : index
    %c0_67 = arith.constant 0 : index
    %131 = vector.load %arg18[%c0_66, %c0_67] : memref<1x16xf32, #tpu.memory_space<vmem>>, vector<1x16xf32>
    %132 = vector.broadcast %131 : vector<1x16xf32> to vector<8x16xf32>
    %133 = arith.mulf %130, %132 : vector<8x16xf32>
    %cst_68 = arith.constant dense<0.000000e+00> : vector<8xf32>
    %134 = vector.multi_reduction <add>, %133, %cst_68 [1] : vector<8x16xf32> to vector<8xf32>
    %135 = vector.shape_cast %134 : vector<8xf32> to vector<8x1xf32>
    %c0_69 = arith.constant 0 : index
    %c0_70 = arith.constant 0 : index
    %136 = vector.load %arg19[%c0_69, %c0_70] : memref<1x1xf32, #tpu.memory_space<vmem>>, vector<1x1xf32>
    %137 = vector.broadcast %136 : vector<1x1xf32> to vector<8x1xf32>
    %138 = arith.addf %135, %137 : vector<8x1xf32>
    %c0_71 = arith.constant 0 : index
    %c0_72 = arith.constant 0 : index
    %139 = vector.load %arg20[%c0_71, %c0_72] : memref<8x1xf32, #tpu.memory_space<vmem>>, vector<8x1xf32>
    tpu.vector_store %arg20[%c0_71, %c0_72], %138 {strides = array<i32>} : memref<8x1xf32, #tpu.memory_space<vmem>>, vector<8x1xf32>,
    return
  }
}

</mosaic_0001>

<llo_original>
// kernel: tpu_custom_call.1
$region0: #{tpu_custom_call.1}
  #allocation0 [shape = 'u32[]', space=smem, size = 0x4, offset = 0x4, fixed_abs, tag = 'smem constant byte address 0x4 - core index']
  #allocation1 [shape = 'u32[72,128]{1,0:T(1,128)}', space=vmem, size = 0x9000, scoped, tag = 'internal scratch']
  #allocation2 [shape = 'f32[1,1]{1,0:T(1,128)S(1)}', space=vmem, size = 0x200, scoped, tag = 'scoped memory for tpu_custom_call.1']
  %s0 = inlined_call_operand.vmem [shape: f32[8,175], index: 0, kind: input, shape index: {}]
  %s1 = inlined_call_operand.vmem [shape: f32[8,16], index: 1, kind: input, shape index: {}]
  %s2 = inlined_call_operand.vmem [shape: f32[175,128], index: 2, kind: input, shape index: {}]
  %s3 = inlined_call_operand.vmem [shape: f32[1,128], index: 3, kind: input, shape index: {}]
  %s4 = inlined_call_operand.vmem [shape: f32[1,128], index: 4, kind: input, shape index: {}]
  %s5 = inlined_call_operand.vmem [shape: f32[1,128], index: 5, kind: input, shape index: {}]
  %s6 = inlined_call_operand.vmem [shape: f32[128,64], index: 6, kind: input, shape index: {}]
  %s7 = inlined_call_operand.vmem [shape: f32[1,64], index: 7, kind: input, shape index: {}]
  %s8 = inlined_call_operand.vmem [shape: f32[1,64], index: 8, kind: input, shape index: {}]
  %s9 = inlined_call_operand.vmem [shape: f32[1,64], index: 9, kind: input, shape index: {}]
  %s10 = inlined_call_operand.hbm [shape: f32[64,64], index: 10, kind: input, shape index: {}]
  %s11 = inlined_call_operand.vmem [shape: f32[1,64], index: 11, kind: input, shape index: {}]
  %s12 = inlined_call_operand.vmem [shape: f32[1,64], index: 12, kind: input, shape index: {}]
  %s13 = inlined_call_operand.vmem [shape: f32[1,64], index: 13, kind: input, shape index: {}]
  %s14 = inlined_call_operand.vmem [shape: f32[64,16], index: 14, kind: input, shape index: {}]
  %s15 = inlined_call_operand.vmem [shape: f32[1,16], index: 15, kind: input, shape index: {}]
  %s16 = inlined_call_operand.vmem [shape: f32[1,16], index: 16, kind: input, shape index: {}]
  %s17 = inlined_call_operand.vmem [shape: f32[1,16], index: 17, kind: input, shape index: {}]
  %s18 = inlined_call_operand.vmem [shape: f32[1,16], index: 18, kind: input, shape index: {}]
  %s19 = inlined_call_operand.<no memory space> [shape: f32[1,1], index: 19, kind: input, shape index: {}]
  %s20 = inlined_call_operand.vmem [shape: f32[8,1], index: 20, kind: output, shape index: {}]
  %s21 = sld [smem:[#allocation0]]
  $region94: #{tpu_custom_call.1} parent=0
    _
  %s23 = ssub.s32 1, %s21
  %s24 = scalar_select 0, %s23, %s21
  %v25 = vstv %s19
  %26 = vst [vmem:[#allocation2] sm:$0x1] %v25
  $region1: #{tpu_custom_call.1} parent=0
    #allocation3 [shape = 'u8[32768]{0}', space=vmem, size = 0x8000, scoped, tag = 'input window, operand 10, single buffered']
    #allocation4 [shape = 's32[1]{0}', space=sflag, size = 0x4, scoped, tag = 'scoped memory for tpu_custom_call.1']
    %27 = vsyncpa [#allocation4], 0
    // Predicated region
    $region2: #{tpu_custom_call.1} parent=1 // pred_check
      _
    $region3: #{tpu_custom_call.1} parent=1 // pred_check_branch
      %29 = sbr.rel (0) target = $region5
    $region4: #{tpu_custom_call.1} parent=1 // pred_region
      _
    $region5: #{tpu_custom_call.1} parent=1 // pred_fallthru
      _
    // Predicated region
    $region6: #{tpu_custom_call.1} parent=1 // pred_check
      _
    $region7: #{tpu_custom_call.1} parent=1 // pred_check_branch
      %31 = sbr.rel (0) target = $region9
    $region8: #{tpu_custom_call.1} parent=1 // pred_region
      _
    $region9: #{tpu_custom_call.1} parent=1 // pred_fallthru
      _
    // Predicated region
    $region10: #{tpu_custom_call.1} parent=1 // pred_check
      _
    $region11: #{tpu_custom_call.1} parent=1 // pred_check_branch
      %33 = sbr.rel (0) target = $region13
    $region12: #{tpu_custom_call.1} parent=1 // pred_region
      _
    $region13: #{tpu_custom_call.1} parent=1 // pred_fallthru
      _
    // Predicated region
    $region14: #{tpu_custom_call.1} parent=1 // pred_check
      _
    $region15: #{tpu_custom_call.1} parent=1 // pred_check_branch
      %35 = sbr.rel (0) target = $region17
    $region16: #{tpu_custom_call.1} parent=1 // pred_region
      _
    $region17: #{tpu_custom_call.1} parent=1 // pred_fallthru
      _
    // Predicated region
    $region18: #{tpu_custom_call.1} parent=1 // pred_check
      _
    $region19: #{tpu_custom_call.1} parent=1 // pred_check_branch
      %37 = sbr.rel (0) target = $region21
    $region20: #{tpu_custom_call.1} parent=1 // pred_region
      _
    $region21: #{tpu_custom_call.1} parent=1 // pred_fallthru
      _
    // Predicated region
    $region22: #{tpu_custom_call.1} parent=1 // pred_check
      _
    $region23: #{tpu_custom_call.1} parent=1 // pred_check_branch
      %39 = sbr.rel (0) target = $region25
    $region24: #{tpu_custom_call.1} parent=1 // pred_region
      _
    $region25: #{tpu_custom_call.1} parent=1 // pred_fallthru
      _
    // Predicated region
    $region26: #{tpu_custom_call.1} parent=1 // pred_check
      _
    $region27: #{tpu_custom_call.1} parent=1 // pred_check_branch
      %41 = sbr.rel (0) target = $region29
    $region28: #{tpu_custom_call.1} parent=1 // pred_region
      _
    $region29: #{tpu_custom_call.1} parent=1 // pred_fallthru
      _
    // Predicated region
    $region30: #{tpu_custom_call.1} parent=1 // pred_check
      _
    $region31: #{tpu_custom_call.1} parent=1 // pred_check_branch
      %43 = sbr.rel (0) target = $region33
    $region32: #{tpu_custom_call.1} parent=1 // pred_region
      _
    $region33: #{tpu_custom_call.1} parent=1 // pred_fallthru
      _
    // Predicated region
    $region34: #{tpu_custom_call.1} parent=1 // pred_check
      _
    $region35: #{tpu_custom_call.1} parent=1 // pred_check_branch
      %45 = sbr.rel (0) target = $region37
    $region36: #{tpu_custom_call.1} parent=1 // pred_region
      _
    $region37: #{tpu_custom_call.1} parent=1 // pred_fallthru
      _
    // Predicated region
    $region38: #{tpu_custom_call.1} parent=1 // pred_check
      _
    $region39: #{tpu_custom_call.1} parent=1 // pred_check_branch
      %47 = sbr.rel (0) target = $region41
    $region40: #{tpu_custom_call.1} parent=1 // pred_region
      _
    $region41: #{tpu_custom_call.1} parent=1 // pred_fallthru
      _
    // Predicated region
    $region42: #{tpu_custom_call.1} parent=1 // pred_check
      _
    $region43: #{tpu_custom_call.1} parent=1 // pred_check_branch
      %49 = sbr.rel (0) target = $region45
    $region44: #{tpu_custom_call.1} parent=1 // pred_region
      %51 = vsyncadd [#allocation4], 0
      %s52 = sshll.u32 %s10, 4
      %s53 = int_to_ptr.hbm [resolvable:$true] %s52
      %s54 = sshll.u32 [#allocation3], 4
      %s55 = int_to_ptr.vmem [resolvable:$true] %s54
      %60 = dma.hbm_to_vmem [thread:$0]  %s53, 1024, %s55, [#allocation4], 128, 128, 8
    $region45: #{tpu_custom_call.1} parent=1 // pred_fallthru
      _
    // Predicated region
    $region46: #{tpu_custom_call.1} parent=1 // pred_check
      _
    $region47: #{tpu_custom_call.1} parent=1 // pred_check_branch
      %62 = sbr.rel (0) target = $region49
    $region48: #{tpu_custom_call.1} parent=1 // pred_region
      _
    $region49: #{tpu_custom_call.1} parent=1 // pred_fallthru
      _
    // Predicated region
    $region50: #{tpu_custom_call.1} parent=1 // pred_check
      _
    $region51: #{tpu_custom_call.1} parent=1 // pred_check_branch
      %64 = sbr.rel (0) target = $region53
    $region52: #{tpu_custom_call.1} parent=1 // pred_region
      _
    $region53: #{tpu_custom_call.1} parent=1 // pred_fallthru
      _
    // Predicated region
    $region54: #{tpu_custom_call.1} parent=1 // pred_check
      _
    $region55: #{tpu_custom_call.1} parent=1 // pred_check_branch
      %66 = sbr.rel (0) target = $region57
    $region56: #{tpu_custom_call.1} parent=1 // pred_region
      _
    $region57: #{tpu_custom_call.1} parent=1 // pred_fallthru
      _
    // Predicated region
    $region58: #{tpu_custom_call.1} parent=1 // pred_check
      _
    $region59: #{tpu_custom_call.1} parent=1 // pred_check_branch
      %68 = sbr.rel (0) target = $region61
    $region60: #{tpu_custom_call.1} parent=1 // pred_region
      _
    $region61: #{tpu_custom_call.1} parent=1 // pred_fallthru
      _
    // Predicated region
    $region62: #{tpu_custom_call.1} parent=1 // pred_check
      _
    $region63: #{tpu_custom_call.1} parent=1 // pred_check_branch
      %70 = sbr.rel (0) target = $region65
    $region64: #{tpu_custom_call.1} parent=1 // pred_region
      _
    $region65: #{tpu_custom_call.1} parent=1 // pred_fallthru
      _
    // Predicated region
    $region66: #{tpu_custom_call.1} parent=1 // pred_check
      _
    $region67: #{tpu_custom_call.1} parent=1 // pred_check_branch
      %72 = sbr.rel (0) target = $region69
    $region68: #{tpu_custom_call.1} parent=1 // pred_region
      _
    $region69: #{tpu_custom_call.1} parent=1 // pred_fallthru
      _
    // Predicated region
    $region70: #{tpu_custom_call.1} parent=1 // pred_check
      _
    $region71: #{tpu_custom_call.1} parent=1 // pred_check_branch
      %74 = sbr.rel (0) target = $region73
    $region72: #{tpu_custom_call.1} parent=1 // pred_region
      _
    $region73: #{tpu_custom_call.1} parent=1 // pred_fallthru
      _
    // Predicated region
    $region74: #{tpu_custom_call.1} parent=1 // pred_check
      _
    $region75: #{tpu_custom_call.1} parent=1 // pred_check_branch
      %76 = sbr.rel (0) target = $region77
    $region76: #{tpu_custom_call.1} parent=1 // pred_region
      _
    $region77: #{tpu_custom_call.1} parent=1 // pred_fallthru
      _
    // Predicated region
    $region78: #{tpu_custom_call.1} parent=1 // pred_check
      _
    $region79: #{tpu_custom_call.1} parent=1 // pred_check_branch
      %78 = sbr.rel (0) target = $region81
    $region80: #{tpu_custom_call.1} parent=1 // pred_region
      _
    $region81: #{tpu_custom_call.1} parent=1 // pred_fallthru
      _
    // Predicated region
    $region82: #{tpu_custom_call.1} parent=1 // pred_check
      _
    $region83: #{tpu_custom_call.1} parent=1 // pred_check_branch
      %80 = sbr.rel (0) target = $region85
    $region84: #{tpu_custom_call.1} parent=1 // pred_region
      %82 = dma.done [#allocation4], 1024
    $region85: #{tpu_custom_call.1} parent=1 // pred_fallthru
      _
    %v83 = vld [vmem:[%s0] sm:$0xff]
    %v84 = vld [vmem:[%s0 + $0x8] sm:$0xff]
    %v85 = vld [vmem:[%s2] sm:$0xff]
    %v86 = vld [vmem:[%s2 + $0x8] sm:$0xff]
    %v87 = vld [vmem:[%s2 + $0x10] sm:$0xff]
    %v88 = vld [vmem:[%s2 + $0x18] sm:$0xff]
    %v89 = vld [vmem:[%s2 + $0x20] sm:$0xff]
    %v90 = vld [vmem:[%s2 + $0x28] sm:$0xff]
    %v91 = vld [vmem:[%s2 + $0x30] sm:$0xff]
    %v92 = vld [vmem:[%s2 + $0x38] sm:$0xff]
    %v93 = vld [vmem:[%s2 + $0x40] sm:$0xff]
    %v94 = vld [vmem:[%s2 + $0x48] sm:$0xff]
    %v95 = vld [vmem:[%s2 + $0x50] sm:$0xff]
    %v96 = vld [vmem:[%s2 + $0x58] sm:$0xff]
    %v97 = vld [vmem:[%s2 + $0x60] sm:$0xff]
    %v98 = vld [vmem:[%s2 + $0x68] sm:$0xff]
    %v99 = vld [vmem:[%s2 + $0x70] sm:$0xff]
    %v100 = vld [vmem:[%s2 + $0x78] sm:$0xff]
    %v101 = vld [vmem:[%s2 + $0x80] sm:$0xff]
    %v102 = vld [vmem:[%s2 + $0x88] sm:$0xff]
    %v103 = vld [vmem:[%s2 + $0x90] sm:$0xff]
    %v104 = vld [vmem:[%s2 + $0x98] sm:$0xff]
    %v105 = vld [vmem:[%s2 + $0xa0] sm:$0xff]
    %v106 = vld [vmem:[%s2 + $0xa8] sm:$0x7f]
    %v107 = vld [vmem:[%s3] sm:$0x1]
    %v109 = vperm.slane %v107, 0
    %vm111 = vcmask 384000
    %v113 = vsel %vm111, %v84, 0
    %vm115 = vcmask 1046528
    %v117 = vsel %vm115, %v106, 0
    %119 = vmatpush.msra.mxu0 %v100
    %120 = vmatpush.msra.mxu0 %v99
    %121 = vmatpush.msra.mxu0 %v98
    %122 = vmatpush.msra.mxu0 %v97
    %123 = vmatpush.msra.mxu0 %v96
    %124 = vmatpush.msra.mxu0 %v95
    %125 = vmatpush.msra.mxu0 %v94
    %126 = vmatpush.msra.mxu0 %v93
    %127 = vmatpush.msra.mxu0 %v92
    %128 = vmatpush.msra.mxu0 %v91
    %129 = vmatpush.msra.mxu0 %v90
    %130 = vmatpush.msra.mxu0 %v89
    %131 = vmatpush.msra.mxu0 %v88
    %132 = vmatpush.msra.mxu0 %v87
    %133 = vmatpush.msra.mxu0 %v86
    %134 = vmatpush.msra.mxu0 %v85
    %135 = vmatmul.f32.gmra.mxu0 %v83
    %v136 = vpop.f32.mrf.mxu0
    %v137 = vadd.f32 %v109, %v136
    %138 = vdwg.mxu0
    %139 = vmatpush.msra.mxu0 0.0
    %140 = vmatpush.msra.mxu0 0.0
    %141 = vmatpush.msra.mxu0 0.0
    %142 = vmatpush.msra.mxu0 0.0
    %143 = vmatpush.msra.mxu0 0.0
    %144 = vmatpush.msra.mxu0 0.0
    %145 = vmatpush.msra.mxu0 0.0
    %146 = vmatpush.msra.mxu0 0.0
    %147 = vmatpush.msra.mxu0 0.0
    %148 = vmatpush.msra.mxu0 0.0
    %149 = vmatpush.msra.mxu0 %v117
    %150 = vmatpush.msra.mxu0 %v105
    %151 = vmatpush.msra.mxu0 %v104
    %152 = vmatpush.msra.mxu0 %v103
    %153 = vmatpush.msra.mxu0 %v102
    %154 = vmatpush.msra.mxu0 %v101
    %155 = vmatmul.f32.gmra.mxu0 %v113
    %v156 = vpop.f32.mrf.mxu0
    %v157 = vadd.f32 %v137, %v156
    %158 = vdwg.mxu0
    %v159 = vmax.f32 %v157, 0.0
    %v160 = vrot.slane %v159, 4
    %v161 = vadd.f32 %v159, %v160
    %v162 = vrot.slane %v161, 2
    %v163 = vadd.f32 %v161, %v162
    %v164 = vrot.slane %v163, 1
    %v165 = vadd.f32 %v163, %v164
    %v166 = vmul.f32 %v159, %v159
    %v167 = vrot.slane %v166, 4
    %v168 = vadd.f32 %v166, %v167
    %v169 = vrot.slane %v168, 2
    %v170 = vadd.f32 %v168, %v169
    %v171 = vrot.slane %v170, 1
    %v172 = vadd.f32 %v170, %v171
    %v173 = vmul.f32 %v165, 0.125
    %v174 = vmul.f32 %v172, 0.125
    %v175 = vmul.f32 %v173, %v173
    %v176 = vsub.f32 %v174, %v175
    %v177 = vmax.f32 %v176, 0.0
    %v178 = vld [vmem:[%s4] sm:$0x1]
    %v179 = vadd.f32 %v177, 1e-05
    %v180 = vrsqrt.pop %v179
    %v181 = vmul.f32 %v180, %v179
    %v182 = vmul.f32 %v181, %v180
    %v183 = vmul.f32 0.5, %v182
    %v184 = vsub.f32 1.5, %v183
    %v185 = vmul.f32 %v180, %v184
    %vm186 = vweird.f32 %v179
    %vm187 = vweird.f32 %v180
    %vm188 = vmor %vm186, %vm187
    %v189 = vsel %vm188, %v180, %v185
    %v190 = vmul.f32 %v178, %v189
    %v191 = vld [vmem:[%s5] sm:$0x1]
    %v192 = vmul.f32 %v173, %v190
    %v193 = vsub.f32 %v191, %v192
    %v195 = vperm.slane %v190, 0
    %v197 = vmul.f32 %v159, %v195
    %v199 = vperm.slane %v193, 0
    %v201 = vadd.f32 %v197, %v199
    %v202 = vld [vmem:[%s6] sm:$0xff]
    %v203 = vld [vmem:[%s6 + $0x8] sm:$0xff]
    %v204 = vld [vmem:[%s6 + $0x10] sm:$0xff]
    %v205 = vld [vmem:[%s6 + $0x18] sm:$0xff]
    %v206 = vld [vmem:[%s6 + $0x20] sm:$0xff]
    %v207 = vld [vmem:[%s6 + $0x28] sm:$0xff]
    %v208 = vld [vmem:[%s6 + $0x30] sm:$0xff]
    %v209 = vld [vmem:[%s6 + $0x38] sm:$0xff]
    %v210 = vld [vmem:[%s6 + $0x40] sm:$0xff]
    %v211 = vld [vmem:[%s6 + $0x48] sm:$0xff]
    %v212 = vld [vmem:[%s6 + $0x50] sm:$0xff]
    %v213 = vld [vmem:[%s6 + $0x58] sm:$0xff]
    %v214 = vld [vmem:[%s6 + $0x60] sm:$0xff]
    %v215 = vld [vmem:[%s6 + $0x68] sm:$0xff]
    %v216 = vld [vmem:[%s6 + $0x70] sm:$0xff]
    %v217 = vld [vmem:[%s6 + $0x78] sm:$0xff]
    %v218 = vld [vmem:[%s7] sm:$0x1]
    %v220 = vperm.slane %v218, 0
    %222 = vmatpush.msra.mxu0 %v217
    %223 = vmatpush.msra.mxu0 %v216
    %224 = vmatpush.msra.mxu0 %v215
    %225 = vmatpush.msra.mxu0 %v214
    %226 = vmatpush.msra.mxu0 %v213
    %227 = vmatpush.msra.mxu0 %v212
    %228 = vmatpush.msra.mxu0 %v211
    %229 = vmatpush.msra.mxu0 %v210
    %230 = vmatpush.msra.mxu0 %v209
    %231 = vmatpush.msra.mxu0 %v208
    %232 = vmatpush.msra.mxu0 %v207
    %233 = vmatpush.msra.mxu0 %v206
    %234 = vmatpush.msra.mxu0 %v205
    %235 = vmatpush.msra.mxu0 %v204
    %236 = vmatpush.msra.mxu0 %v203
    %237 = vmatpush.msra.mxu0 %v202
    %238 = vmatmul.f32.gmra.mxu0 %v201
    %v239 = vpop.f32.mrf.mxu0
    %v240 = vadd.f32 %v220, %v239
    %241 = vdwg.mxu0
    %v242 = vmax.f32 %v240, 0.0
    %vm243 = vcmask 523264
    %v244 = vsel %vm243, %v242, 0.0
    %v245 = vrot.slane %v244, 4
    %v246 = vadd.f32 %v244, %v245
    %v247 = vrot.slane %v246, 2
    %v248 = vadd.f32 %v246, %v247
    %v249 = vrot.slane %v248, 1
    %v250 = vadd.f32 %v248, %v249
    %v251 = vmul.f32 %v242, %v242
    %v252 = vsel %vm243, %v251, 0.0
    %v253 = vrot.slane %v252, 4
    %v254 = vadd.f32 %v252, %v253
    %v255 = vrot.slane %v254, 2
    %v256 = vadd.f32 %v254, %v255
    %v257 = vrot.slane %v256, 1
    %v258 = vadd.f32 %v256, %v257
    %v259 = vmul.f32 %v250, 0.125
    %v260 = vmul.f32 %v258, 0.125
    %v261 = vmul.f32 %v259, %v259
    %v262 = vsub.f32 %v260, %v261
    %v263 = vmax.f32 %v262, 0.0
    %v264 = vld [vmem:[%s8] sm:$0x1]
    %v265 = vadd.f32 %v263, 1e-05
    %v266 = vrsqrt.pop %v265
    %v267 = vmul.f32 %v266, %v265
    %v268 = vmul.f32 %v267, %v266
    %v269 = vmul.f32 0.5, %v268
    %v270 = vsub.f32 1.5, %v269
    %v271 = vmul.f32 %v266, %v270
    %vm272 = vweird.f32 %v265
    %vm273 = vweird.f32 %v266
    %vm274 = vmor %vm272, %vm273
    %v275 = vsel %vm274, %v266, %v271
    %v276 = vmul.f32 %v264, %v275
    %v277 = vld [vmem:[%s9] sm:$0x1]
    %v278 = vmul.f32 %v259, %v276
    %v279 = vsub.f32 %v277, %v278
    %v281 = vperm.slane %v276, 0
    %v283 = vmul.f32 %v242, %v281
    %v285 = vperm.slane %v279, 0
    %v287 = vadd.f32 %v283, %v285
    %v288 = vld [vmem:[#allocation3] sm:$0xff]
    %v289 = vld [vmem:[#allocation3 + $0x8] sm:$0xff]
    %v290 = vld [vmem:[#allocation3 + $0x10] sm:$0xff]
    %v291 = vld [vmem:[#allocation3 + $0x18] sm:$0xff]
    %v292 = vld [vmem:[#allocation3 + $0x20] sm:$0xff]
    %v293 = vld [vmem:[#allocation3 + $0x28] sm:$0xff]
    %v294 = vld [vmem:[#allocation3 + $0x30] sm:$0xff]
    %v295 = vld [vmem:[#allocation3 + $0x38] sm:$0xff]
    %v296 = vld [vmem:[%s11] sm:$0x1]
    %v298 = vperm.slane %v296, 0
    %v301 = vsel %vm243, %v287, 0
    %303 = vmatpush.msra.mxu0 0.0
    %304 = vmatpush.msra.mxu0 0.0
    %305 = vmatpush.msra.mxu0 0.0
    %306 = vmatpush.msra.mxu0 0.0
    %307 = vmatpush.msra.mxu0 0.0
    %308 = vmatpush.msra.mxu0 0.0
    %309 = vmatpush.msra.mxu0 0.0
    %310 = vmatpush.msra.mxu0 0.0
    %311 = vmatpush.msra.mxu0 %v295
    %312 = vmatpush.msra.mxu0 %v294
    %313 = vmatpush.msra.mxu0 %v293
    %314 = vmatpush.msra.mxu0 %v292
    %315 = vmatpush.msra.mxu0 %v291
    %316 = vmatpush.msra.mxu0 %v290
    %317 = vmatpush.msra.mxu0 %v289
    %318 = vmatpush.msra.mxu0 %v288
    %319 = vmatmul.f32.gmra.mxu0 %v301
    %v320 = vpop.f32.mrf.mxu0
    %v321 = vadd.f32 %v298, %v320
    %322 = vdwg.mxu0
    %v323 = vmax.f32 %v321, 0.0
    %v324 = vsel %vm243, %v323, 0.0
    %v325 = vrot.slane %v324, 4
    %v326 = vadd.f32 %v324, %v325
    %v327 = vrot.slane %v326, 2
    %v328 = vadd.f32 %v326, %v327
    %v329 = vrot.slane %v328, 1
    %v330 = vadd.f32 %v328, %v329
    %v331 = vmul.f32 %v323, %v323
    %v332 = vsel %vm243, %v331, 0.0
    %v333 = vrot.slane %v332, 4
    %v334 = vadd.f32 %v332, %v333
    %v335 = vrot.slane %v334, 2
    %v336 = vadd.f32 %v334, %v335
    %v337 = vrot.slane %v336, 1
    %v338 = vadd.f32 %v336, %v337
    %v339 = vmul.f32 %v330, 0.125
    %v340 = vmul.f32 %v338, 0.125
    %v341 = vmul.f32 %v339, %v339
    %v342 = vsub.f32 %v340, %v341
    %v343 = vmax.f32 %v342, 0.0
    %v344 = vld [vmem:[%s12] sm:$0x1]
    %v345 = vadd.f32 %v343, 1e-05
    %v346 = vrsqrt.pop %v345
    %v347 = vmul.f32 %v346, %v345
    %v348 = vmul.f32 %v347, %v346
    %v349 = vmul.f32 0.5, %v348
    %v350 = vsub.f32 1.5, %v349
    %v351 = vmul.f32 %v346, %v350
    %vm352 = vweird.f32 %v345
    %vm353 = vweird.f32 %v346
    %vm354 = vmor %vm352, %vm353
    %v355 = vsel %vm354, %v346, %v351
    %v356 = vmul.f32 %v344, %v355
    %v357 = vld [vmem:[%s13] sm:$0x1]
    %v358 = vmul.f32 %v339, %v356
    %v359 = vsub.f32 %v357, %v358
    %v361 = vperm.slane %v356, 0
    %v363 = vmul.f32 %v323, %v361
    %v365 = vperm.slane %v359, 0
    %v367 = vadd.f32 %v363, %v365
    %v368 = vld [vmem:[%s14] sm:$0xff]
    %v369 = vld [vmem:[%s14 + $0x8] sm:$0xff]
    %v370 = vld [vmem:[%s14 + $0x10] sm:$0xff]
    %v371 = vld [vmem:[%s14 + $0x18] sm:$0xff]
    %v372 = vld [vmem:[%s14 + $0x20] sm:$0xff]
    %v373 = vld [vmem:[%s14 + $0x28] sm:$0xff]
    %v374 = vld [vmem:[%s14 + $0x30] sm:$0xff]
    %v375 = vld [vmem:[%s14 + $0x38] sm:$0xff]
    %v376 = vld [vmem:[%s15] sm:$0x1]
    %v378 = vperm.slane %v376, 0
    %v381 = vsel %vm243, %v367, 0
    %383 = vmatpush.msra.mxu0 0.0
    %384 = vmatpush.msra.mxu0 0.0
    %385 = vmatpush.msra.mxu0 0.0
    %386 = vmatpush.msra.mxu0 0.0
    %387 = vmatpush.msra.mxu0 0.0
    %388 = vmatpush.msra.mxu0 0.0
    %389 = vmatpush.msra.mxu0 0.0
    %390 = vmatpush.msra.mxu0 0.0
    %391 = vmatpush.msra.mxu0 %v375
    %392 = vmatpush.msra.mxu0 %v374
    %393 = vmatpush.msra.mxu0 %v373
    %394 = vmatpush.msra.mxu0 %v372
    %395 = vmatpush.msra.mxu0 %v371
    %396 = vmatpush.msra.mxu0 %v370
    %397 = vmatpush.msra.mxu0 %v369
    %398 = vmatpush.msra.mxu0 %v368
    %399 = vmatmul.f32.gmra.mxu0 %v381
    %v400 = vpop.f32.mrf.mxu0
    %v401 = vadd.f32 %v378, %v400
    %402 = vdwg.mxu0
    %v403 = vmax.f32 %v401, 0.0
    %vm404 = vcmask 130048
    %v405 = vsel %vm404, %v403, 0.0
    %v406 = vrot.slane %v405, 4
    %v407 = vadd.f32 %v405, %v406
    %v408 = vrot.slane %v407, 2
    %v409 = vadd.f32 %v407, %v408
    %v410 = vrot.slane %v409, 1
    %v411 = vadd.f32 %v409, %v410
    %v412 = vmul.f32 %v403, %v403
    %v413 = vsel %vm404, %v412, 0.0
    %v414 = vrot.slane %v413, 4
    %v415 = vadd.f32 %v413, %v414
    %v416 = vrot.slane %v415, 2
    %v417 = vadd.f32 %v415, %v416
    %v418 = vrot.slane %v417, 1
    %v419 = vadd.f32 %v417, %v418
    %v420 = vmul.f32 %v411, 0.125
    %v421 = vmul.f32 %v419, 0.125
    %v422 = vmul.f32 %v420, %v420
    %v423 = vsub.f32 %v421, %v422
    %v424 = vmax.f32 %v423, 0.0
    %v425 = vld [vmem:[%s16] sm:$0x1]
    %v426 = vadd.f32 %v424, 1e-05
    %v427 = vrsqrt.pop %v426
    %v428 = vmul.f32 %v427, %v426
    %v429 = vmul.f32 %v428, %v427
    %v430 = vmul.f32 0.5, %v429
    %v431 = vsub.f32 1.5, %v430
    %v432 = vmul.f32 %v427, %v431
    %vm433 = vweird.f32 %v426
    %vm434 = vweird.f32 %v427
    %vm435 = vmor %vm433, %vm434
    %v436 = vsel %vm435, %v427, %v432
    %v437 = vmul.f32 %v425, %v436
    %v438 = vld [vmem:[%s17] sm:$0x1]
    %v439 = vmul.f32 %v420, %v437
    %v440 = vsub.f32 %v438, %v439
    %v442 = vperm.slane %v437, 0
    %v444 = vmul.f32 %v403, %v442
    %v446 = vperm.slane %v440, 0
    %v448 = vadd.f32 %v444, %v446
    %v449 = vld [vmem:[%s1] sm:$0xff]
    %v450 = vmul.f32 %v448, %v449
    %v451 = vld [vmem:[%s18] sm:$0x1]
    %v453 = vperm.slane %v451, 0
    %v455 = vmul.f32 %v450, %v453
    %v456 = vsel %vm404, %v455, 0.0
    %457 = vadd.xlane.f32.xlu0 %v456
    %v458 = vpop.xlane.xlu0 %457
    %v459 = vld [vmem:[#allocation2] sm:$0x1]
    %v461 = vperm.slane %v459, 0
    %v463 = vadd.f32 %v458, %v461
    %vm464 = vcmask 7168
    %465 = vst.msk [vmem:[%s20] sm:$0xff] %vm464, %v463
    // Predicated region
    $region86: #{tpu_custom_call.1} parent=1 // pred_check
      _
    $region87: #{tpu_custom_call.1} parent=1 // pred_check_branch
      %467 = sbr.rel (0) target = $region89
    $region88: #{tpu_custom_call.1} parent=1 // pred_region
      _
    $region89: #{tpu_custom_call.1} parent=1 // pred_fallthru
      _
    // Predicated region
    $region90: #{tpu_custom_call.1} parent=1 // pred_check
      _
    $region91: #{tpu_custom_call.1} parent=1 // pred_check_branch
      %469 = sbr.rel (0) target = $region93
    $region92: #{tpu_custom_call.1} parent=1 // pred_region
      _
    $region93: #{tpu_custom_call.1} parent=1 // pred_fallthru
      _
    %470 = vsyncpa [#allocation4], 1

</llo_original>
